<compile_context>
chip_gen: v6e
topology: v6e:2x2x1
jax: 0.10.0
libtpu: 0.0.40
codegen_flags: <defaults>
</compile_context>

<pallas_src>
import functools

import jax
import jax.numpy as jnp
from jax.experimental import pallas as pl
from jax.experimental.pallas import tpu as pltpu

HIDDEN = 128  # fixed by nn.Linear(compressed_dim, 128)


def _cdiv(a, b):
    return (a + b - 1) // b


def _round_up(x, m):
    return ((x + m - 1) // m) * m


def _decoder_kernel(x_ref, w1_ref, b1_ref, w2_ref, b2_ref, o_ref):
    # Two MXU matmuls (bf16 in, f32 accumulate) + f32 bias/ReLU epilogue.
    x = x_ref[...].astype(jnp.bfloat16)                               # (TB, Cin)
    h = jnp.dot(x, w1_ref[...], preferred_element_type=jnp.float32)   # (TB, 128)
    h = jnp.maximum(h + b1_ref[...], 0.0)                             # bias + ReLU (f32 VPU)
    out = jnp.dot(h.astype(jnp.bfloat16), w2_ref[...],
                  preferred_element_type=jnp.float32)                 # (TB, S*F)
    o_ref[...] = (out + b2_ref[...]).astype(o_ref.dtype)


def _xla_forward(x, w1, b1, w2, b2, out_dtype):
    # Small-batch fallback: same bf16-in / f32-accumulate recipe, plain XLA.
    h = jnp.dot(x.astype(jnp.bfloat16), w1.astype(jnp.bfloat16),
                preferred_element_type=jnp.float32)
    h = jnp.maximum(h + b1, 0.0)
    out = jnp.dot(h.astype(jnp.bfloat16), w2.astype(jnp.bfloat16),
                  preferred_element_type=jnp.float32)
    return (out + b2).astype(out_dtype)


def _choose_tiling(B, block_batch, split_min=16):
    """Pick (tb, b_pad, n_steps): minimal padding, grid >= 2 for B >= split_min."""
    b8 = _round_up(max(B, 1), 8)
    n_steps = _cdiv(b8, block_batch)
    if b8 >= split_min:
        n_steps = max(n_steps, 2)          # let both v7x TensorCores see work
    tb = _round_up(_cdiv(b8, n_steps), 8)
    n_steps = _cdiv(b8, tb)
    return tb, n_steps * tb, n_steps


def simple_decoder_forward(x, w1, b1, w2, b2, seq_len, feature, *,
                           block_batch=2048, min_pallas_batch=256,
                           out_dtype=jnp.bfloat16):
    """x: (B, compressed_dim) f32 -> (B, seq_len, feature) out_dtype."""
    B, cin = x.shape
    out_dim = seq_len * feature
    assert w1.shape == (cin, HIDDEN)
    assert b1.shape == (1, HIDDEN)
    assert w2.shape == (HIDDEN, out_dim)
    assert b2.shape == (1, out_dim)

    if B < min_pallas_batch:
        # One-tile Pallas grid is pure launch/DMA overhead; let XLA do it.
        return _xla_forward(x, w1, b1, w2, b2, out_dtype).reshape(B, seq_len, feature)

    # Weights in bf16 (MXU-native, VMEM-resident); biases stay f32 (v5e VPU has no bf16).
    w1_c = w1.astype(jnp.bfloat16)
    w2_c = w2.astype(jnp.bfloat16)
    b1_c = b1.astype(jnp.float32)
    b2_c = b2.astype(jnp.float32)

    tb, b_pad, n_steps = _choose_tiling(B, block_batch)
    x_in = x if b_pad == B else jnp.pad(x, ((0, b_pad - B), (0, 0)))

    out_itemsize = jnp.dtype(out_dtype).itemsize
    flops = 2 * b_pad * (cin * HIDDEN + HIDDEN * out_dim)
    bytes_accessed = (
        b_pad * cin * 4                 # x (f32, cast in-kernel)
        + cin * HIDDEN * 2              # w1 (bf16)
        + HIDDEN * out_dim * 2          # w2 (bf16)
        + (HIDDEN + out_dim) * 4        # biases (f32)
        + b_pad * out_dim * out_itemsize  # output
    )

    resident = pl.Buffered(buffer_count=1)  # params never re-fetched; skip 2nd buffer

    out = pl.pallas_call(
        _decoder_kernel,
        out_shape=jax.ShapeDtypeStruct((b_pad, out_dim), out_dtype),
        grid=(n_steps,),
        in_specs=[
            pl.BlockSpec((tb, cin), lambda i: (i, 0)),          # x: tiled over batch
            pl.BlockSpec((cin, HIDDEN), lambda i: (0, 0), pipeline_mode=resident),
            pl.BlockSpec((1, HIDDEN), lambda i: (0, 0), pipeline_mode=resident),
            pl.BlockSpec((HIDDEN, out_dim), lambda i: (0, 0), pipeline_mode=resident),
            pl.BlockSpec((1, out_dim), lambda i: (0, 0), pipeline_mode=resident),
        ],
        out_specs=pl.BlockSpec((tb, out_dim), lambda i: (i, 0)),
        compiler_params=pltpu.CompilerParams(
            # TODO(synk): try pltpu.CORE_PARALLEL on v7x once validated there.
            dimension_semantics=("parallel",),
        ),
        cost_estimate=pl.CostEstimate(
            flops=flops, transcendentals=0, bytes_accessed=bytes_accessed
        ),
    )(x_in, w1_c, b1_c, w2_c, b2_c)

    if b_pad != B:
        out = out[:B]
    return out.reshape(B, seq_len, feature)


def init_params(key, compressed_dim, hidden, out_dim):
    """Deterministic synthetic parameters (PyTorch-Linear-like uniform init)."""
    k1, k2, k3, k4 = jax.random.split(key, 4)
    s1 = 1.0 / jnp.sqrt(compressed_dim)
    s2 = 1.0 / jnp.sqrt(hidden)
    # Stored as (in, out) so the kernel does x @ W (== PyTorch x @ W.T).
    w1 = jax.random.uniform(k1, (compressed_dim, hidden), jnp.float32, -s1, s1)
    b1 = jax.random.uniform(k2, (1, hidden), jnp.float32, -s1, s1)
    w2 = jax.random.uniform(k3, (hidden, out_dim), jnp.float32, -s2, s2)
    b2 = jax.random.uniform(k4, (1, out_dim), jnp.float32, -s2, s2)
    return w1, b1, w2, b2


if __name__ == "__main__":
    # Shapes consistent with the module spec (feature=6, seq_len=128).
    batch = 2
    compressed_dim = 32
    seq_len = 128
    feature = 6
    out_dim = seq_len * feature  # 768 -> lane-dense (multiple of 128)

    key = jax.random.PRNGKey(0)
    kx, kp = jax.random.split(key)
    x = jax.random.normal(kx, (batch, compressed_dim), jnp.float32)
    w1, b1, w2, b2 = init_params(kp, compressed_dim, HIDDEN, out_dim)

    # Force the Pallas path at this small batch (min_pallas_batch=1) so the
    # kernel itself is exercised; default dispatch would use the XLA fallback.
    fwd_pallas = jax.jit(functools.partial(
        simple_decoder_forward, seq_len=seq_len, feature=feature, min_pallas_batch=1))
    y = jax.block_until_ready(fwd_pallas(x, w1, b1, w2, b2))
    assert y.shape == (batch, seq_len, feature)
    assert y.dtype == jnp.bfloat16
    y32 = y.astype(jnp.float32)

    # Reference with the exact same dtype recipe (bf16 in, f32 accumulate, bf16 out).
    xb, w1b, w2b = (a.astype(jnp.bfloat16) for a in (x, w1, w2))
    h_ref = jnp.maximum(jnp.dot(xb, w1b, preferred_element_type=jnp.float32) + b1, 0.0)
    y_ref = (jnp.dot(h_ref.astype(jnp.bfloat16), w2b,
                     preferred_element_type=jnp.float32) + b2
             ).astype(jnp.bfloat16).reshape(batch, seq_len, feature)
    assert jnp.allclose(y32, y_ref.astype(jnp.float32), atol=2e-2, rtol=2e-2), \
        "mismatch vs bf16-recipe reference"

    # Sanity check against full-f32 PyTorch-equivalent math (bf16 noise tolerance).
    y_f32 = (jnp.maximum(x @ w1 + b1, 0.0) @ w2 + b2).reshape(batch, seq_len, feature)
    assert jnp.allclose(y32, y_f32, atol=1e-1, rtol=1e-1), "mismatch vs f32 reference"

    # Default dispatch at B=2 takes the XLA small-batch fallback; must agree.
    fwd_auto = jax.jit(functools.partial(
        simple_decoder_forward, seq_len=seq_len, feature=feature))
    y_fb = jax.block_until_ready(fwd_auto(x, w1, b1, w2, b2))
    assert jnp.allclose(y32, y_fb.astype(jnp.float32), atol=2e-2, rtol=2e-2), \
        "Pallas path and XLA fallback disagree"

    print("KERNEL_OK")
</pallas_src>

<mosaic_0001>
module attributes {stable_mosaic.version = 11 : i64} {
  func.func @_decoder_kernel(%arg0: i32, %arg1: memref<8x32xf32, #tpu.memory_space<vmem>>, %arg2: memref<32x128xbf16, #tpu.memory_space<vmem>>, %arg3: memref<1x128xf32, #tpu.memory_space<vmem>>, %arg4: memref<128x768xbf16, #tpu.memory_space<vmem>>, %arg5: memref<1x768xf32, #tpu.memory_space<vmem>>, %arg6: memref<8x768xbf16, #tpu.memory_space<vmem>>) attributes {dimension_semantics = [#tpu.dimension_semantics<parallel>], iteration_bounds = array<i64: 1>, scalar_prefetch = 0 : i64, scratch_operands = 0 : i64, tpu.core_type = #tpu.core_type<tc>, window_params = [{transform_indices = @transform_0, window_bounds = array<i64: 8, 32>}, {pipeline_mode = #tpu.pipeline_mode<synchronous>, transform_indices = @transform_1, window_bounds = array<i64: 32, 128>}, {pipeline_mode = #tpu.pipeline_mode<synchronous>, transform_indices = @transform_2, window_bounds = array<i64: 1, 128>}, {pipeline_mode = #tpu.pipeline_mode<synchronous>, transform_indices = @transform_3, window_bounds = array<i64: 128, 768>}, {pipeline_mode = #tpu.pipeline_mode<synchronous>, transform_indices = @transform_4, window_bounds = array<i64: 1, 768>}, {transform_indices = @transform_5, window_bounds = array<i64: 8, 768>}]} {
    %c0 = arith.constant 0 : index
    %c0_0 = arith.constant 0 : index
    %0 = vector.load %arg1[%c0, %c0_0] : memref<8x32xf32, #tpu.memory_space<vmem>>, vector<8x32xf32>
    %1 = arith.truncf %0 : vector<8x32xf32> to vector<8x32xbf16>
    %c0_1 = arith.constant 0 : index
    %c0_2 = arith.constant 0 : index
    %2 = vector.load %arg2[%c0_1, %c0_2] : memref<32x128xbf16, #tpu.memory_space<vmem>>, vector<32x128xbf16>
    %cst = arith.constant dense<0.000000e+00> : vector<8x128xf32>
    %3 = tpu.matmul %1, %2, %cst {dimension_numbers = #tpu.dot_dimension_numbers<[1], [0], [0], [1], [0, 0, 1, 1], [], []>} : vector<8x32xbf16>, vector<32x128xbf16>, vector<8x128xf32> -> vector<8x128xf32>
    %c0_3 = arith.constant 0 : index
    %c0_4 = arith.constant 0 : index
    %4 = vector.load %arg3[%c0_3, %c0_4] : memref<1x128xf32, #tpu.memory_space<vmem>>, vector<1x128xf32>
    %5 = vector.broadcast %4 : vector<1x128xf32> to vector<8x128xf32>
    %6 = arith.addf %3, %5 : vector<8x128xf32>
    %cst_5 = arith.constant 0.000000e+00 : f32
    %7 = vector.broadcast %cst_5 : f32 to vector<8x128xf32>
    %8 = arith.maximumf %6, %7 : vector<8x128xf32>
    %9 = arith.truncf %8 : vector<8x128xf32> to vector<8x128xbf16>
    %c0_6 = arith.constant 0 : index
    %c0_7 = arith.constant 0 : index
    %10 = vector.load %arg4[%c0_6, %c0_7] : memref<128x768xbf16, #tpu.memory_space<vmem>>, vector<128x768xbf16>
    %cst_8 = arith.constant dense<0.000000e+00> : vector<8x768xf32>
    %11 = tpu.matmul %9, %10, %cst_8 {dimension_numbers = #tpu.dot_dimension_numbers<[1], [0], [0], [1], [0, 0, 1, 1], [], []>} : vector<8x128xbf16>, vector<128x768xbf16>, vector<8x768xf32> -> vector<8x768xf32>
    %c0_9 = arith.constant 0 : index
    %c0_10 = arith.constant 0 : index
    %12 = vector.load %arg5[%c0_9, %c0_10] : memref<1x768xf32, #tpu.memory_space<vmem>>, vector<1x768xf32>
    %13 = vector.broadcast %12 : vector<1x768xf32> to vector<8x768xf32>
    %14 = arith.addf %11, %13 : vector<8x768xf32>
    %15 = arith.truncf %14 : vector<8x768xf32> to vector<8x768xbf16>
    %c0_11 = arith.constant 0 : index
    %c0_12 = arith.constant 0 : index
    %16 = vector.load %arg6[%c0_11, %c0_12] : memref<8x768xbf16, #tpu.memory_space<vmem>>, vector<8x768xbf16>
    tpu.vector_store %arg6[%c0_11, %c0_12], %15 {strides = array<i32>} : memref<8x768xbf16, #tpu.memory_space<vmem>>, vector<8x768xbf16>,
    return
  }
  func.func @transform_0(%arg0: i32) -> (i32, i32) {
    %c0_i32 = arith.constant 0 : i32
    %c0_i32_0 = arith.constant 0 : i32
    return %arg0, %c0_i32 : i32, i32
  }
  func.func @transform_1(%arg0: i32) -> (i32, i32) {
    %c0_i32 = arith.constant 0 : i32
    %c0_i32_0 = arith.constant 0 : i32
    %c0_i32_1 = arith.constant 0 : i32
    return %c0_i32, %c0_i32_0 : i32, i32
  }
  func.func @transform_2(%arg0: i32) -> (i32, i32) {
    %c0_i32 = arith.constant 0 : i32
    %c0_i32_0 = arith.constant 0 : i32
    %c0_i32_1 = arith.constant 0 : i32
    return %c0_i32, %c0_i32_0 : i32, i32
  }
  func.func @transform_3(%arg0: i32) -> (i32, i32) {
    %c0_i32 = arith.constant 0 : i32
    %c0_i32_0 = arith.constant 0 : i32
    %c0_i32_1 = arith.constant 0 : i32
    return %c0_i32, %c0_i32_0 : i32, i32
  }
  func.func @transform_4(%arg0: i32) -> (i32, i32) {
    %c0_i32 = arith.constant 0 : i32
    %c0_i32_0 = arith.constant 0 : i32
    %c0_i32_1 = arith.constant 0 : i32
    return %c0_i32, %c0_i32_0 : i32, i32
  }
  func.func @transform_5(%arg0: i32) -> (i32, i32) {
    %c0_i32 = arith.constant 0 : i32
    %c0_i32_0 = arith.constant 0 : i32
    return %arg0, %c0_i32 : i32, i32
  }
}

</mosaic_0001>

<llo_original>
// kernel: simple_decoder_forward.1
$region0: #{simple_decoder_forward.1}
  #allocation0 [shape = 'u32[]', space=smem, size = 0x4, offset = 0x4, fixed_abs, tag = 'smem constant byte address 0x4 - core index']
  #allocation1 [shape = 'u32[144,128]{1,0:T(1,128)}', space=vmem, size = 0x12000, scoped, tag = 'internal scratch']
  %s0 = inlined_call_operand.vmem [shape: f32[8,32], index: 0, kind: input, shape index: {}]
  %s1 = inlined_call_operand.vmem [shape: bf16[32,128], index: 1, kind: input, shape index: {}]
  %s2 = inlined_call_operand.vmem [shape: f32[1,128], index: 2, kind: input, shape index: {}]
  %s3 = inlined_call_operand.vmem [shape: bf16[128,768], index: 3, kind: input, shape index: {}]
  %s4 = inlined_call_operand.vmem [shape: f32[1,768], index: 4, kind: input, shape index: {}]
  %s5 = inlined_call_operand.vmem [shape: bf16[8,768], index: 5, kind: output, shape index: {}]
  %s6 = sld [smem:[#allocation0]]
  $region30: #{simple_decoder_forward.1} parent=0
    _
  %s8 = ssub.s32 1, %s6
  %s9 = scalar_select 0, %s8, %s6
  // Predicated region
  $region2: #{simple_decoder_forward.1} parent=0 // pred_check
    _
  $region3: #{simple_decoder_forward.1} parent=0 // pred_check_branch
    %11 = sbr.rel (0) target = $region5
  $region4: #{simple_decoder_forward.1} parent=0 // pred_region
    _
  $region5: #{simple_decoder_forward.1} parent=0 // pred_fallthru
    _
  // Predicated region
  $region6: #{simple_decoder_forward.1} parent=0 // pred_check
    _
  $region7: #{simple_decoder_forward.1} parent=0 // pred_check_branch
    %13 = sbr.rel (0) target = $region9
  $region8: #{simple_decoder_forward.1} parent=0 // pred_region
    _
  $region9: #{simple_decoder_forward.1} parent=0 // pred_fallthru
    _
  // Predicated region
  $region10: #{simple_decoder_forward.1} parent=0 // pred_check
    _
  $region11: #{simple_decoder_forward.1} parent=0 // pred_check_branch
    %15 = sbr.rel (0) target = $region13
  $region12: #{simple_decoder_forward.1} parent=0 // pred_region
    _
  $region13: #{simple_decoder_forward.1} parent=0 // pred_fallthru
    _
  // Predicated region
  $region14: #{simple_decoder_forward.1} parent=0 // pred_check
    _
  $region15: #{simple_decoder_forward.1} parent=0 // pred_check_branch
    %17 = sbr.rel (0) target = $region17
  $region16: #{simple_decoder_forward.1} parent=0 // pred_region
    _
  $region17: #{simple_decoder_forward.1} parent=0 // pred_fallthru
    _
  // Predicated region
  $region18: #{simple_decoder_forward.1} parent=0 // pred_check
    _
  $region19: #{simple_decoder_forward.1} parent=0 // pred_check_branch
    %19 = sbr.rel (0) target = $region21
  $region20: #{simple_decoder_forward.1} parent=0 // pred_region
    _
  $region21: #{simple_decoder_forward.1} parent=0 // pred_fallthru
    _
  %v21 = vld [vmem:[%s0] sm:$0xff]
  %v22 = vpack.c.bf16 %v21, %v21
  %v23 = vld [vmem:[%s1] sm:$0xf]
  %v24 = vld [vmem:[%s1 + $0x4] sm:$0xf]
  %v25 = vld [vmem:[%s1 + $0x8] sm:$0xf]
  %v26 = vld [vmem:[%s1 + $0xc] sm:$0xf]
  %v27 = vld [vmem:[%s2] sm:$0x1]
  %v29 = vlaneseq
  %v30 = vshrl.u32 %v29, 7
  %v31 = vsub.s32 0, %v30
  %v32 = vrot.slane %v27, %v31
  %v38 = vunpack.c.l.b16 %v23
  %v39 = vunpack.c.l.b16 %v24
  %v40 = vunpack.c.l.b16 %v25
  %v41 = vunpack.c.l.b16 %v26
  %v42 = vpack.c.b16 %v39, %v38
  %v43 = vpack.c.b16 %v41, %v40
  %vm46 = vcmask 261120
  %v48 = vsel %vm46, %v22, 0
  %50 = vmatprep.subr.bf16.mxu0 0
  %51 = vmatpush1.bf16.msra.mxu0 0
  %52 = vmatprep.subr.bf16.mxu0 0
  %53 = vmatpush1.bf16.msra.mxu0 0
  %54 = vmatprep.subr.bf16.mxu0 0
  %55 = vmatpush1.bf16.msra.mxu0 0
  %56 = vmatprep.subr.bf16.mxu0 0
  %57 = vmatpush1.bf16.msra.mxu0 0
  %58 = vmatprep.subr.bf16.mxu0 0
  %59 = vmatpush1.bf16.msra.mxu0 0
  %60 = vmatprep.subr.bf16.mxu0 0
  %61 = vmatpush1.bf16.msra.mxu0 0
  %62 = vmatprep.subr.bf16.mxu0 0
  %63 = vmatpush1.bf16.msra.mxu0 %v43
  %64 = vmatprep.subr.bf16.mxu0 0
  %65 = vmatpush1.bf16.msra.mxu0 %v42
  %66 = vmatprep.subr.bf16.mxu0 0
  %67 = vmatpush2.bf16.msra.mxu0 0
  %68 = vmatprep.subr.bf16.mxu0 0
  %69 = vmatpush2.bf16.msra.mxu0 0
  %70 = vmatprep.subr.bf16.mxu0 0
  %71 = vmatpush2.bf16.msra.mxu0 0
  %72 = vmatprep.subr.bf16.mxu0 0
  %73 = vmatpush2.bf16.msra.mxu0 0
  %74 = vmatprep.subr.bf16.mxu0 0
  %75 = vmatpush2.bf16.msra.mxu0 0
  %76 = vmatprep.subr.bf16.mxu0 0
  %77 = vmatpush2.bf16.msra.mxu0 0
  %78 = vmatprep.subr.bf16.mxu0 0
  %79 = vmatpush2.bf16.msra.mxu0 0
  %80 = vmatprep.subr.bf16.mxu0 0
  %81 = vmatpush2.bf16.msra.mxu0 0
  %82 = vmatprep.mubr.bf16.mxu0 0
  %83 = vmatmul.mubr.bf16.gmra.mxu0 %v48
  %v84 = vpop.f32.mrf.mxu0
  %v85 = vadd.f32 %v32, %v84
  %v86 = vpop.f32.mrf.mxu0
  %v87 = vpop.f32.mrf.mxu0
  %v88 = vpop.f32.mrf.mxu0
  %89 = vdwg.mxu0
  %v90 = vmax.f32 %v85, 0.0
  %v91 = vpack.c.bf16 %v90, %v90
  %v92 = vld [vmem:[%s3] sm:$0xff]
  %v93 = vld [vmem:[%s3 + $0x8] sm:$0xff]
  %v94 = vld [vmem:[%s3 + $0x10] sm:$0xff]
  %v95 = vld [vmem:[%s3 + $0x18] sm:$0xff]
  %v96 = vld [vmem:[%s3 + $0x20] sm:$0xff]
  %v97 = vld [vmem:[%s3 + $0x28] sm:$0xff]
  %v98 = vld [vmem:[%s3 + $0x30] sm:$0xff]
  %v99 = vld [vmem:[%s3 + $0x38] sm:$0xff]
  %v100 = vld [vmem:[%s3 + $0x40] sm:$0xff]
  %v101 = vld [vmem:[%s3 + $0x48] sm:$0xff]
  %v102 = vld [vmem:[%s3 + $0x50] sm:$0xff]
  %v103 = vld [vmem:[%s3 + $0x58] sm:$0xff]
  %v104 = vld [vmem:[%s3 + $0x60] sm:$0xff]
  %v105 = vld [vmem:[%s3 + $0x68] sm:$0xff]
  %v106 = vld [vmem:[%s3 + $0x70] sm:$0xff]
  %v107 = vld [vmem:[%s3 + $0x78] sm:$0xff]
  %v108 = vld [vmem:[%s3 + $0x80] sm:$0xff]
  %v109 = vld [vmem:[%s3 + $0x88] sm:$0xff]
  %v110 = vld [vmem:[%s3 + $0x90] sm:$0xff]
  %v111 = vld [vmem:[%s3 + $0x98] sm:$0xff]
  %v112 = vld [vmem:[%s3 + $0xa0] sm:$0xff]
  %v113 = vld [vmem:[%s3 + $0xa8] sm:$0xff]
  %v114 = vld [vmem:[%s3 + $0xb0] sm:$0xff]
  %v115 = vld [vmem:[%s3 + $0xb8] sm:$0xff]
  %v116 = vld [vmem:[%s3 + $0xc0] sm:$0xff]
  %v117 = vld [vmem:[%s3 + $0xc8] sm:$0xff]
  %v118 = vld [vmem:[%s3 + $0xd0] sm:$0xff]
  %v119 = vld [vmem:[%s3 + $0xd8] sm:$0xff]
  %v120 = vld [vmem:[%s3 + $0xe0] sm:$0xff]
  %v121 = vld [vmem:[%s3 + $0xe8] sm:$0xff]
  %v122 = vld [vmem:[%s3 + $0xf0] sm:$0xff]
  %v123 = vld [vmem:[%s3 + $0xf8] sm:$0xff]
  %v124 = vld [vmem:[%s3 + $0x100] sm:$0xff]
  %v125 = vld [vmem:[%s3 + $0x108] sm:$0xff]
  %v126 = vld [vmem:[%s3 + $0x110] sm:$0xff]
  %v127 = vld [vmem:[%s3 + $0x118] sm:$0xff]
  %v128 = vld [vmem:[%s3 + $0x120] sm:$0xff]
  %v129 = vld [vmem:[%s3 + $0x128] sm:$0xff]
  %v130 = vld [vmem:[%s3 + $0x130] sm:$0xff]
  %v131 = vld [vmem:[%s3 + $0x138] sm:$0xff]
  %v132 = vld [vmem:[%s3 + $0x140] sm:$0xff]
  %v133 = vld [vmem:[%s3 + $0x148] sm:$0xff]
  %v134 = vld [vmem:[%s3 + $0x150] sm:$0xff]
  %v135 = vld [vmem:[%s3 + $0x158] sm:$0xff]
  %v136 = vld [vmem:[%s3 + $0x160] sm:$0xff]
  %v137 = vld [vmem:[%s3 + $0x168] sm:$0xff]
  %v138 = vld [vmem:[%s3 + $0x170] sm:$0xff]
  %v139 = vld [vmem:[%s3 + $0x178] sm:$0xff]
  %v140 = vld [vmem:[%s4] sm:$0x3f]
  %v142 = vlaneseq
  %v143 = vshrl.u32 %v142, 7
  %v144 = vsub.s32 0, %v143
  %v145 = vrot.slane %v140, %v144
  %v146 = vlaneseq
  %v147 = vshrl.u32 %v146, 7
  %v148 = vsub.s32 1, %v147
  %v149 = vrot.slane %v140, %v148
  %v150 = vlaneseq
  %v151 = vshrl.u32 %v150, 7
  %v152 = vsub.s32 2, %v151
  %v153 = vrot.slane %v140, %v152
  %v154 = vlaneseq
  %v155 = vshrl.u32 %v154, 7
  %v156 = vsub.s32 3, %v155
  %v157 = vrot.slane %v140, %v156
  %v158 = vlaneseq
  %v159 = vshrl.u32 %v158, 7
  %v160 = vsub.s32 4, %v159
  %v161 = vrot.slane %v140, %v160
  %v162 = vlaneseq
  %v163 = vshrl.u32 %v162, 7
  %v164 = vsub.s32 5, %v163
  %v165 = vrot.slane %v140, %v164
  %v220 = vunpack.c.l.b16 %v92
  %v221 = vunpack.c.h.b16 %v92
  %v222 = vunpack.c.l.b16 %v93
  %v223 = vunpack.c.h.b16 %v93
  %v224 = vunpack.c.l.b16 %v94
  %v225 = vunpack.c.h.b16 %v94
  %v226 = vunpack.c.l.b16 %v95
  %v227 = vunpack.c.h.b16 %v95
  %v228 = vunpack.c.l.b16 %v96
  %v229 = vunpack.c.h.b16 %v96
  %v230 = vunpack.c.l.b16 %v97
  %v231 = vunpack.c.h.b16 %v97
  %v232 = vunpack.c.l.b16 %v98
  %v233 = vunpack.c.h.b16 %v98
  %v234 = vunpack.c.l.b16 %v99
  %v235 = vunpack.c.h.b16 %v99
  %v236 = vunpack.c.l.b16 %v100
  %v237 = vunpack.c.h.b16 %v100
  %v238 = vunpack.c.l.b16 %v101
  %v239 = vunpack.c.h.b16 %v101
  %v240 = vunpack.c.l.b16 %v102
  %v241 = vunpack.c.h.b16 %v102
  %v242 = vunpack.c.l.b16 %v103
  %v243 = vunpack.c.h.b16 %v103
  %v244 = vunpack.c.l.b16 %v104
  %v245 = vunpack.c.h.b16 %v104
  %v246 = vunpack.c.l.b16 %v105
  %v247 = vunpack.c.h.b16 %v105
  %v248 = vunpack.c.l.b16 %v106
  %v249 = vunpack.c.h.b16 %v106
  %v250 = vunpack.c.l.b16 %v107
  %v251 = vunpack.c.h.b16 %v107
  %v252 = vunpack.c.l.b16 %v108
  %v253 = vunpack.c.h.b16 %v108
  %v254 = vunpack.c.l.b16 %v109
  %v255 = vunpack.c.h.b16 %v109
  %v256 = vunpack.c.l.b16 %v110
  %v257 = vunpack.c.h.b16 %v110
  %v258 = vunpack.c.l.b16 %v111
  %v259 = vunpack.c.h.b16 %v111
  %v260 = vunpack.c.l.b16 %v112
  %v261 = vunpack.c.h.b16 %v112
  %v262 = vunpack.c.l.b16 %v113
  %v263 = vunpack.c.h.b16 %v113
  %v264 = vunpack.c.l.b16 %v114
  %v265 = vunpack.c.h.b16 %v114
  %v266 = vunpack.c.l.b16 %v115
  %v267 = vunpack.c.h.b16 %v115
  %v268 = vunpack.c.l.b16 %v116
  %v269 = vunpack.c.h.b16 %v116
  %v270 = vunpack.c.l.b16 %v117
  %v271 = vunpack.c.h.b16 %v117
  %v272 = vunpack.c.l.b16 %v118
  %v273 = vunpack.c.h.b16 %v118
  %v274 = vunpack.c.l.b16 %v119
  %v275 = vunpack.c.h.b16 %v119
  %v276 = vunpack.c.l.b16 %v120
  %v277 = vunpack.c.h.b16 %v120
  %v278 = vunpack.c.l.b16 %v121
  %v279 = vunpack.c.h.b16 %v121
  %v280 = vunpack.c.l.b16 %v122
  %v281 = vunpack.c.h.b16 %v122
  %v282 = vunpack.c.l.b16 %v123
  %v283 = vunpack.c.h.b16 %v123
  %v284 = vunpack.c.l.b16 %v124
  %v285 = vunpack.c.h.b16 %v124
  %v286 = vunpack.c.l.b16 %v125
  %v287 = vunpack.c.h.b16 %v125
  %v288 = vunpack.c.l.b16 %v126
  %v289 = vunpack.c.h.b16 %v126
  %v290 = vunpack.c.l.b16 %v127
  %v291 = vunpack.c.h.b16 %v127
  %v292 = vunpack.c.l.b16 %v128
  %v293 = vunpack.c.h.b16 %v128
  %v294 = vunpack.c.l.b16 %v129
  %v295 = vunpack.c.h.b16 %v129
  %v296 = vunpack.c.l.b16 %v130
  %v297 = vunpack.c.h.b16 %v130
  %v298 = vunpack.c.l.b16 %v131
  %v299 = vunpack.c.h.b16 %v131
  %v300 = vunpack.c.l.b16 %v132
  %v301 = vunpack.c.h.b16 %v132
  %v302 = vunpack.c.l.b16 %v133
  %v303 = vunpack.c.h.b16 %v133
  %v304 = vunpack.c.l.b16 %v134
  %v305 = vunpack.c.h.b16 %v134
  %v306 = vunpack.c.l.b16 %v135
  %v307 = vunpack.c.h.b16 %v135
  %v308 = vunpack.c.l.b16 %v136
  %v309 = vunpack.c.h.b16 %v136
  %v310 = vunpack.c.l.b16 %v137
  %v311 = vunpack.c.h.b16 %v137
  %v312 = vunpack.c.l.b16 %v138
  %v313 = vunpack.c.h.b16 %v138
  %v314 = vunpack.c.l.b16 %v139
  %v315 = vunpack.c.h.b16 %v139
  %v316 = vpack.c.b16 %v226, %v220
  %v317 = vpack.c.b16 %v227, %v221
  %v318 = vpack.c.b16 %v228, %v222
  %v319 = vpack.c.b16 %v229, %v223
  %v320 = vpack.c.b16 %v230, %v224
  %v321 = vpack.c.b16 %v231, %v225
  %v322 = vpack.c.b16 %v238, %v232
  %v323 = vpack.c.b16 %v239, %v233
  %v324 = vpack.c.b16 %v240, %v234
  %v325 = vpack.c.b16 %v241, %v235
  %v326 = vpack.c.b16 %v242, %v236
  %v327 = vpack.c.b16 %v243, %v237
  %v328 = vpack.c.b16 %v250, %v244
  %v329 = vpack.c.b16 %v251, %v245
  %v330 = vpack.c.b16 %v252, %v246
  %v331 = vpack.c.b16 %v253, %v247
  %v332 = vpack.c.b16 %v254, %v248
  %v333 = vpack.c.b16 %v255, %v249
  %v334 = vpack.c.b16 %v262, %v256
  %v335 = vpack.c.b16 %v263, %v257
  %v336 = vpack.c.b16 %v264, %v258
  %v337 = vpack.c.b16 %v265, %v259
  %v338 = vpack.c.b16 %v266, %v260
  %v339 = vpack.c.b16 %v267, %v261
  %v340 = vpack.c.b16 %v274, %v268
  %v341 = vpack.c.b16 %v275, %v269
  %v342 = vpack.c.b16 %v276, %v270
  %v343 = vpack.c.b16 %v277, %v271
  %v344 = vpack.c.b16 %v278, %v272
  %v345 = vpack.c.b16 %v279, %v273
  %v346 = vpack.c.b16 %v286, %v280
  %v347 = vpack.c.b16 %v287, %v281
  %v348 = vpack.c.b16 %v288, %v282
  %v349 = vpack.c.b16 %v289, %v283
  %v350 = vpack.c.b16 %v290, %v284
  %v351 = vpack.c.b16 %v291, %v285
  %v352 = vpack.c.b16 %v298, %v292
  %v353 = vpack.c.b16 %v299, %v293
  %v354 = vpack.c.b16 %v300, %v294
  %v355 = vpack.c.b16 %v301, %v295
  %v356 = vpack.c.b16 %v302, %v296
  %v357 = vpack.c.b16 %v303, %v297
  %v358 = vpack.c.b16 %v310, %v304
  %v359 = vpack.c.b16 %v311, %v305
  %v360 = vpack.c.b16 %v312, %v306
  %v361 = vpack.c.b16 %v313, %v307
  %v362 = vpack.c.b16 %v314, %v308
  %v363 = vpack.c.b16 %v315, %v309
  %412 = vmatprep.subr.bf16.mxu0 %v359
  %413 = vmatpush1.bf16.msra.mxu0 %v358
  %414 = vmatprep.subr.bf16.mxu0 %v353
  %415 = vmatpush1.bf16.msra.mxu0 %v352
  %416 = vmatprep.subr.bf16.mxu0 %v347
  %417 = vmatpush1.bf16.msra.mxu0 %v346
  %418 = vmatprep.subr.bf16.mxu0 %v341
  %419 = vmatpush1.bf16.msra.mxu0 %v340
  %420 = vmatprep.subr.bf16.mxu0 %v335
  %421 = vmatpush1.bf16.msra.mxu0 %v334
  %422 = vmatprep.subr.bf16.mxu0 %v329
  %423 = vmatpush1.bf16.msra.mxu0 %v328
  %424 = vmatprep.subr.bf16.mxu0 %v323
  %425 = vmatpush1.bf16.msra.mxu0 %v322
  %426 = vmatprep.subr.bf16.mxu0 %v317
  %427 = vmatpush1.bf16.msra.mxu0 %v316
  %428 = vmatprep.subr.bf16.mxu0 0
  %429 = vmatpush2.bf16.msra.mxu0 0
  %430 = vmatprep.subr.bf16.mxu0 0
  %431 = vmatpush2.bf16.msra.mxu0 0
  %432 = vmatprep.subr.bf16.mxu0 0
  %433 = vmatpush2.bf16.msra.mxu0 0
  %434 = vmatprep.subr.bf16.mxu0 0
  %435 = vmatpush2.bf16.msra.mxu0 0
  %436 = vmatprep.subr.bf16.mxu0 0
  %437 = vmatpush2.bf16.msra.mxu0 0
  %438 = vmatprep.subr.bf16.mxu0 0
  %439 = vmatpush2.bf16.msra.mxu0 0
  %440 = vmatprep.subr.bf16.mxu0 0
  %441 = vmatpush2.bf16.msra.mxu0 0
  %442 = vmatprep.subr.bf16.mxu0 0
  %443 = vmatpush2.bf16.msra.mxu0 0
  %444 = vmatprep.mubr.bf16.mxu0 0
  %445 = vmatmul.mubr.bf16.gmra.mxu0 %v91
  %v446 = vpop.f32.mrf.mxu0
  %v447 = vadd.f32 %v145, %v446
  %v448 = vpop.f32.mrf.mxu0
  %v449 = vadd.f32 %v149, %v448
  %v450 = vpop.f32.mrf.mxu0
  %v451 = vpop.f32.mrf.mxu0
  %452 = vdwg.mxu0
  %453 = vmatprep.subr.bf16.mxu0 %v361
  %454 = vmatpush1.bf16.msra.mxu0 %v360
  %455 = vmatprep.subr.bf16.mxu0 %v355
  %456 = vmatpush1.bf16.msra.mxu0 %v354
  %457 = vmatprep.subr.bf16.mxu0 %v349
  %458 = vmatpush1.bf16.msra.mxu0 %v348
  %459 = vmatprep.subr.bf16.mxu0 %v343
  %460 = vmatpush1.bf16.msra.mxu0 %v342
  %461 = vmatprep.subr.bf16.mxu0 %v337
  %462 = vmatpush1.bf16.msra.mxu0 %v336
  %463 = vmatprep.subr.bf16.mxu0 %v331
  %464 = vmatpush1.bf16.msra.mxu0 %v330
  %465 = vmatprep.subr.bf16.mxu0 %v325
  %466 = vmatpush1.bf16.msra.mxu0 %v324
  %467 = vmatprep.subr.bf16.mxu0 %v319
  %468 = vmatpush1.bf16.msra.mxu0 %v318
  %469 = vmatprep.subr.bf16.mxu0 0
  %470 = vmatpush2.bf16.msra.mxu0 0
  %471 = vmatprep.subr.bf16.mxu0 0
  %472 = vmatpush2.bf16.msra.mxu0 0
  %473 = vmatprep.subr.bf16.mxu0 0
  %474 = vmatpush2.bf16.msra.mxu0 0
  %475 = vmatprep.subr.bf16.mxu0 0
  %476 = vmatpush2.bf16.msra.mxu0 0
  %477 = vmatprep.subr.bf16.mxu0 0
  %478 = vmatpush2.bf16.msra.mxu0 0
  %479 = vmatprep.subr.bf16.mxu0 0
  %480 = vmatpush2.bf16.msra.mxu0 0
  %481 = vmatprep.subr.bf16.mxu0 0
  %482 = vmatpush2.bf16.msra.mxu0 0
  %483 = vmatprep.subr.bf16.mxu0 0
  %484 = vmatpush2.bf16.msra.mxu0 0
  %485 = vmatprep.mubr.bf16.mxu0 0
  %486 = vmatmul.mubr.bf16.gmra.mxu0 %v91
  %v487 = vpop.f32.mrf.mxu0
  %v488 = vadd.f32 %v153, %v487
  %v489 = vpop.f32.mrf.mxu0
  %v490 = vadd.f32 %v157, %v489
  %v491 = vpop.f32.mrf.mxu0
  %v492 = vpop.f32.mrf.mxu0
  %493 = vdwg.mxu0
  %494 = vmatprep.subr.bf16.mxu0 %v363
  %495 = vmatpush1.bf16.msra.mxu0 %v362
  %496 = vmatprep.subr.bf16.mxu0 %v357
  %497 = vmatpush1.bf16.msra.mxu0 %v356
  %498 = vmatprep.subr.bf16.mxu0 %v351
  %499 = vmatpush1.bf16.msra.mxu0 %v350
  %500 = vmatprep.subr.bf16.mxu0 %v345
  %501 = vmatpush1.bf16.msra.mxu0 %v344
  %502 = vmatprep.subr.bf16.mxu0 %v339
  %503 = vmatpush1.bf16.msra.mxu0 %v338
  %504 = vmatprep.subr.bf16.mxu0 %v333
  %505 = vmatpush1.bf16.msra.mxu0 %v332
  %506 = vmatprep.subr.bf16.mxu0 %v327
  %507 = vmatpush1.bf16.msra.mxu0 %v326
  %508 = vmatprep.subr.bf16.mxu0 %v321
  %509 = vmatpush1.bf16.msra.mxu0 %v320
  %510 = vmatprep.subr.bf16.mxu0 0
  %511 = vmatpush2.bf16.msra.mxu0 0
  %512 = vmatprep.subr.bf16.mxu0 0
  %513 = vmatpush2.bf16.msra.mxu0 0
  %514 = vmatprep.subr.bf16.mxu0 0
  %515 = vmatpush2.bf16.msra.mxu0 0
  %516 = vmatprep.subr.bf16.mxu0 0
  %517 = vmatpush2.bf16.msra.mxu0 0
  %518 = vmatprep.subr.bf16.mxu0 0
  %519 = vmatpush2.bf16.msra.mxu0 0
  %520 = vmatprep.subr.bf16.mxu0 0
  %521 = vmatpush2.bf16.msra.mxu0 0
  %522 = vmatprep.subr.bf16.mxu0 0
  %523 = vmatpush2.bf16.msra.mxu0 0
  %524 = vmatprep.subr.bf16.mxu0 0
  %525 = vmatpush2.bf16.msra.mxu0 0
  %526 = vmatprep.mubr.bf16.mxu0 0
  %527 = vmatmul.mubr.bf16.gmra.mxu0 %v91
  %v528 = vpop.f32.mrf.mxu0
  %v529 = vadd.f32 %v161, %v528
  %v530 = vpop.f32.mrf.mxu0
  %v531 = vadd.f32 %v165, %v530
  %v532 = vpop.f32.mrf.mxu0
  %v533 = vpop.f32.mrf.mxu0
  %534 = vdwg.mxu0
  %v535 = vpack.c.bf16 %v447, %v447
  %v536 = vpack.c.bf16 %v449, %v449
  %v537 = vpack.c.bf16 %v488, %v488
  %v538 = vpack.c.bf16 %v490, %v490
  %v539 = vpack.c.bf16 %v529, %v529
  %v540 = vpack.c.bf16 %v531, %v531
  %v547 = vunpack.c.l.b16 %v535
  %v548 = vunpack.c.l.b16 %v536
  %v549 = vunpack.c.l.b16 %v537
  %v550 = vunpack.c.l.b16 %v538
  %v551 = vunpack.c.l.b16 %v539
  %v552 = vunpack.c.l.b16 %v540
  %v553 = vpack.c.b16 %v548, %v547
  %v554 = vpack.c.b16 %v550, %v549
  %v555 = vpack.c.b16 %v552, %v551
  %559 = vst [vmem:[%s5] sm:$0xff] %v553
  %560 = vst [vmem:[%s5 + $0x8] sm:$0xff] %v554
  %561 = vst [vmem:[%s5 + $0x10] sm:$0xff] %v555
  // Predicated region
  $region22: #{simple_decoder_forward.1} parent=0 // pred_check
    _
  $region23: #{simple_decoder_forward.1} parent=0 // pred_check_branch
    %563 = sbr.rel (0) target = $region25
  $region24: #{simple_decoder_forward.1} parent=0 // pred_region
    _
  $region25: #{simple_decoder_forward.1} parent=0 // pred_fallthru
    _
  // Predicated region
  $region26: #{simple_decoder_forward.1} parent=0 // pred_check
    _
  $region27: #{simple_decoder_forward.1} parent=0 // pred_check_branch
    %565 = sbr.rel (0) target = $region29
  $region28: #{simple_decoder_forward.1} parent=0 // pred_region
    _
  $region29: #{simple_decoder_forward.1} parent=0 // pred_fallthru
    _

</llo_original>
